<compile_context>
chip_gen: v7x
topology: tpu7x:2x2x1
jax: 0.10.0
libtpu: 0.0.40
codegen_flags: <defaults>
</compile_context>

<pallas_src>
import functools

import jax
import jax.numpy as jnp
from jax.experimental import pallas as pl
from jax.experimental.pallas import tpu as pltpu

EPS = 1e-12  # matches myNormalize(data, eps=1e-12)


# ---------------------------------------------------------------------------
# Stage 1: power iteration + sigma (tiny, runs once, off the hot path).
# Matrices are (Cout, Wd) = (8, 36); broadcast-multiply + reductions on the
# VPU/XLU are simpler than M=1 MXU matmuls and need no transposed weight copy.
# ---------------------------------------------------------------------------
def power_iter_kernel(w_ref, u_ref, u_out_ref, v_out_ref, sigma_ref):
    w = w_ref[...]                       # (Cout, Wd) f32
    u = u_ref[...]                       # (Cout, 1)  f32

    # v = normalize(W^T u)
    wtu = jnp.sum(w * u, axis=0, keepdims=True)                 # (1, Wd)
    v_new = wtu / (jnp.sqrt(jnp.sum(wtu * wtu)) + EPS)
    # u = normalize(W v)
    wv = jnp.sum(w * v_new, axis=1, keepdims=True)              # (Cout, 1)
    u_new = wv / (jnp.sqrt(jnp.sum(wv * wv)) + EPS)
    # sigma = u . (W v) with the updated u
    sigma = jnp.sum(u_new * wv)

    u_out_ref[...] = u_new
    v_out_ref[...] = v_new
    sigma_ref[0, 0] = sigma


# ---------------------------------------------------------------------------
# Stage 2: conv-as-GEMM hot loop, tiled over (batch, flattened H*W).
#   w_ref: (Cout, Wd)          normalized weight (sigma already applied)
#   b_ref: (Cout, 1)     f32   bias (broadcast over lanes)
#   p_ref: (1, Wd, T)          im2col patches for this sample / hw-tile
#   y_ref: (1, Cout, T)  f32   lane-dense output tile, already in NC(HW) layout
# ---------------------------------------------------------------------------
def conv_gemm_kernel(w_ref, b_ref, p_ref, y_ref):
    y_ref[0] = (
        jnp.dot(w_ref[...], p_ref[0], preferred_element_type=jnp.float32)
        + b_ref[...]
    )


def _choose_tile_hw(hw, n_batch, wd, itemsize, tile_hw=None):
    """Lane tile along the per-sample flattened H*W axis.

    Big tiles amortize the ~0.35 us fixed per-grid-step pipeline overhead and
    give long contiguous DMA rows; the cap is a per-buffer VMEM budget so the
    double-buffered patch tile fits v7x's 32 MiB scoped VMEM with margin.
    When auto-sizing, keep >= 4 total grid steps (>= 2 per TensorCore for v7x
    megacore) whenever the problem is big enough.
    """
    hw_pad = -(-hw // 128) * 128
    auto = tile_hw is None
    if auto:
        budget = 8 * 1024 * 1024                      # bytes per patch buffer
        tile_hw = min(32768, max(128, budget // (wd * itemsize)))
    tile_hw = max(128, min(tile_hw, hw_pad)) // 128 * 128
    if auto:
        while tile_hw > 128 and n_batch * (-(-hw // tile_hw)) < 4:
            tile_hw = max(128, (tile_hw // 2) // 128 * 128)
    return tile_hw


@functools.partial(jax.jit, static_argnames=("tile_hw", "bf16_compute"))
def spectral_norm_conv2d(x, weight, bias, u, tile_hw=None, bf16_compute=True):
    """x: (N, Cin, H, W) NCHW. weight: (Cout, Cin, KH, KW). Returns (y, u_new, v_new)."""
    N, Cin, H, W = x.shape
    Cout, _, KH, KW = weight.shape
    ph, pw = KH // 2, KW // 2                         # 'same' padding for 3x3
    Wd = Cin * KH * KW
    HW = H * W

    w_mat = weight.reshape(Cout, Wd).astype(jnp.float32)

    # ---- stage 1: u/v update + sigma (tiny ungridded pallas_call) ----
    u_new, v_new, sigma = pl.pallas_call(
        power_iter_kernel,
        out_shape=(
            jax.ShapeDtypeStruct((Cout, 1), jnp.float32),
            jax.ShapeDtypeStruct((1, Wd), jnp.float32),
            jax.ShapeDtypeStruct((1, 1), jnp.float32),
        ),
        in_specs=[
            pl.BlockSpec(memory_space=pltpu.MemorySpace.VMEM),
            pl.BlockSpec(memory_space=pltpu.MemorySpace.VMEM),
        ],
        out_specs=(
            pl.BlockSpec(memory_space=pltpu.MemorySpace.VMEM),
            pl.BlockSpec(memory_space=pltpu.MemorySpace.VMEM),
            pl.BlockSpec(memory_space=pltpu.MemorySpace.SMEM),
        ),
    )(w_mat, u.reshape(Cout, 1).astype(jnp.float32))

    # Pre-scale the (tiny) weight once.  No sigma~0 guard, matching PyTorch.
    pdtype = jnp.bfloat16 if bf16_compute else jnp.float32
    w_n = (w_mat / sigma[0, 0]).astype(pdtype)        # (Cout, Wd)
    b_col = bias.reshape(Cout, 1).astype(jnp.float32)

    # ---- glue: im2col built directly in its final (N, Wd, H*W) order ----
    # Tap order matches weight.view(Cout, -1): j = ci*KH*KW + kh*KW + kw.
    # No major-axis transpose: the stack + trailing reshape fuse into one pass.
    xb = jnp.pad(x.astype(pdtype), ((0, 0), (0, 0), (ph, ph), (pw, pw)))
    taps = [xb[:, :, kh:kh + H, kw:kw + W]            # each (N, Cin, H, W)
            for kh in range(KH) for kw in range(KW)]
    pT = jnp.stack(taps, axis=2).reshape(N, Wd, HW)   # (N, Wd, H*W)

    tile_hw = _choose_tile_hw(HW, N, Wd, jnp.dtype(pdtype).itemsize, tile_hw)
    num_tiles = -(-HW // tile_hw)
    HWp = num_tiles * tile_hw
    if HWp != HW:
        pT = jnp.pad(pT, ((0, 0), (0, 0), (0, HWp - HW)))

    # ---- stage 2: pipelined, megacore-parallel, lane-dense GEMM ----
    # Output written directly as (N, Cout, H*W): NCHW result is a free reshape.
    y3 = pl.pallas_call(
        conv_gemm_kernel,
        out_shape=jax.ShapeDtypeStruct((N, Cout, HWp), jnp.float32),
        grid=(N, num_tiles),
        in_specs=[
            pl.BlockSpec((Cout, Wd), lambda n, i: (0, 0)),      # weight: resident
            pl.BlockSpec((Cout, 1), lambda n, i: (0, 0)),       # bias:   resident
            pl.BlockSpec((1, Wd, tile_hw), lambda n, i: (n, 0, i)),
        ],
        out_specs=pl.BlockSpec((1, Cout, tile_hw), lambda n, i: (n, 0, i)),
        compiler_params=pltpu.CompilerParams(
            dimension_semantics=("parallel", "parallel"),       # megacore on v7x
            vmem_limit_bytes=32 * 1024 * 1024,
        ),
    )(w_n, b_col, pT)

    y = y3[:, :, :HW].reshape(N, Cout, H, W)
    return y, u_new.reshape(Cout), v_new.reshape(Wd)


def reference(x, weight, bias, u):
    """Pure-JAX reference mirroring SpectralNorm._update_u_v + Conv2d forward."""
    Cout = weight.shape[0]
    w_mat = weight.reshape(Cout, -1)
    v_n = w_mat.T @ u
    v_n = v_n / (jnp.linalg.norm(v_n) + EPS)
    u_n = w_mat @ v_n
    u_n = u_n / (jnp.linalg.norm(u_n) + EPS)
    sigma = u_n @ (w_mat @ v_n)
    w_sn = weight / sigma
    y = jax.lax.conv_general_dilated(
        x, w_sn, window_strides=(1, 1), padding="SAME",
        dimension_numbers=("NCHW", "OIHW", "NCHW"))
    return y + bias[None, :, None, None], u_n, v_n


if __name__ == "__main__":
    key = jax.random.PRNGKey(0)
    k_w, k_b, k_u, k_x = jax.random.split(key, 4)

    N, Cin, H, W = 2, 4, 16, 16
    Cout, KH, KW = 8, 3, 3

    # SpectralNorm(nn.Conv2d(4, 8, 3, padding=1)) parameters.
    weight = jax.random.normal(k_w, (Cout, Cin, KH, KW), jnp.float32) * 0.1  # weight_bar
    bias = jax.random.normal(k_b, (Cout,), jnp.float32) * 0.1
    u0 = jax.random.normal(k_u, (Cout,), jnp.float32)
    u0 = u0 / (jnp.linalg.norm(u0) + EPS)      # _make_params: myNormalize(u)
    # Note: with power_iteration=1 the stored v is overwritten before use, so
    # it is not an input to the forward computation.

    x = jax.random.normal(k_x, (N, Cin, H, W), jnp.float32)

    y, u_new, v_new = spectral_norm_conv2d(x, weight, bias, u0)
    y = jax.block_until_ready(y)

    y_ref, u_ref, v_ref = reference(x, weight, bias, u0)
    assert y.shape == (N, Cout, H, W)
    assert jnp.allclose(u_new, u_ref, atol=1e-2, rtol=1e-2), "u mismatch vs. reference"
    assert jnp.allclose(v_new, v_ref, atol=1e-2, rtol=1e-2), "v mismatch vs. reference"
    assert jnp.allclose(y, y_ref, atol=1e-2, rtol=1e-2), "y mismatch vs. reference"

    print("KERNEL_OK")
</pallas_src>

<mosaic_0001>
module attributes {stable_mosaic.version = 11 : i64} {
  func.func @power_iter_kernel(%arg0: memref<8x36xf32, #tpu.memory_space<vmem>>, %arg1: memref<8x1xf32, #tpu.memory_space<vmem>>, %arg2: memref<8x1xf32, #tpu.memory_space<vmem>>, %arg3: memref<1x36xf32, #tpu.memory_space<vmem>>, %arg4: memref<1x1xf32, #tpu.memory_space<smem>>) attributes {dimension_semantics = [], scalar_prefetch = 0 : i64, scratch_operands = 0 : i64, tpu.core_type = #tpu.core_type<tc>} {
    %c0 = arith.constant 0 : index
    %c0_0 = arith.constant 0 : index
    %0 = vector.load %arg0[%c0, %c0_0] : memref<8x36xf32, #tpu.memory_space<vmem>>, vector<8x36xf32>
    %c0_1 = arith.constant 0 : index
    %c0_2 = arith.constant 0 : index
    %1 = vector.load %arg1[%c0_1, %c0_2] : memref<8x1xf32, #tpu.memory_space<vmem>>, vector<8x1xf32>
    %2 = vector.broadcast %1 : vector<8x1xf32> to vector<8x36xf32>
    %3 = arith.mulf %0, %2 : vector<8x36xf32>
    %cst = arith.constant dense<0.000000e+00> : vector<36xf32>
    %4 = vector.multi_reduction <add>, %3, %cst [0] : vector<8x36xf32> to vector<36xf32>
    %5 = vector.shape_cast %4 : vector<36xf32> to vector<1x36xf32>
    %6 = arith.mulf %5, %5 : vector<1x36xf32>
    %7 = vector.shape_cast %6 : vector<1x36xf32> to vector<1x1x36xf32>
    %cst_3 = arith.constant dense<0.000000e+00> : vector<1xf32>
    %8 = vector.multi_reduction <add>, %7, %cst_3 [1, 2] : vector<1x1x36xf32> to vector<1xf32>
    %9 = vector.shape_cast %8 : vector<1xf32> to vector<1x1x1xf32>
    %10 = vector.extract %9[0, 0, 0] : f32 from vector<1x1x1xf32>
    %11 = math.sqrt %10 : f32
    %cst_4 = arith.constant 9.99999996E-13 : f32
    %12 = arith.addf %11, %cst_4 : f32
    %13 = vector.broadcast %12 : f32 to vector<1x36xf32>
    %14 = arith.divf %5, %13 : vector<1x36xf32>
    %15 = vector.broadcast %14 : vector<1x36xf32> to vector<8x36xf32>
    %16 = arith.mulf %0, %15 : vector<8x36xf32>
    %cst_5 = arith.constant dense<0.000000e+00> : vector<8xf32>
    %17 = vector.multi_reduction <add>, %16, %cst_5 [1] : vector<8x36xf32> to vector<8xf32>
    %18 = vector.shape_cast %17 : vector<8xf32> to vector<8x1xf32>
    %19 = arith.mulf %18, %18 : vector<8x1xf32>
    %20 = vector.shape_cast %19 : vector<8x1xf32> to vector<1x8x1xf32>
    %cst_6 = arith.constant dense<0.000000e+00> : vector<1xf32>
    %21 = vector.multi_reduction <add>, %20, %cst_6 [1, 2] : vector<1x8x1xf32> to vector<1xf32>
    %22 = vector.shape_cast %21 : vector<1xf32> to vector<1x1x1xf32>
    %23 = vector.extract %22[0, 0, 0] : f32 from vector<1x1x1xf32>
    %24 = math.sqrt %23 : f32
    %cst_7 = arith.constant 9.99999996E-13 : f32
    %25 = arith.addf %24, %cst_7 : f32
    %26 = vector.broadcast %25 : f32 to vector<8x1xf32>
    %27 = arith.divf %18, %26 : vector<8x1xf32>
    %28 = arith.mulf %27, %18 : vector<8x1xf32>
    %29 = vector.shape_cast %28 : vector<8x1xf32> to vector<1x8x1xf32>
    %cst_8 = arith.constant dense<0.000000e+00> : vector<1xf32>
    %30 = vector.multi_reduction <add>, %29, %cst_8 [1, 2] : vector<1x8x1xf32> to vector<1xf32>
    %31 = vector.shape_cast %30 : vector<1xf32> to vector<1x1x1xf32>
    %32 = vector.extract %31[0, 0, 0] : f32 from vector<1x1x1xf32>
    %c0_9 = arith.constant 0 : index
    %c0_10 = arith.constant 0 : index
    %33 = vector.load %arg2[%c0_9, %c0_10] : memref<8x1xf32, #tpu.memory_space<vmem>>, vector<8x1xf32>
    tpu.vector_store %arg2[%c0_9, %c0_10], %27 {strides = array<i32>} : memref<8x1xf32, #tpu.memory_space<vmem>>, vector<8x1xf32>,
    %c0_11 = arith.constant 0 : index
    %c0_12 = arith.constant 0 : index
    %34 = vector.load %arg3[%c0_11, %c0_12] : memref<1x36xf32, #tpu.memory_space<vmem>>, vector<1x36xf32>
    tpu.vector_store %arg3[%c0_11, %c0_12], %14 {strides = array<i32>} : memref<1x36xf32, #tpu.memory_space<vmem>>, vector<1x36xf32>,
    %c0_13 = arith.constant 0 : index
    %c0_14 = arith.constant 0 : index
    %35 = memref.load %arg4[%c0_13, %c0_14] : memref<1x1xf32, #tpu.memory_space<smem>>
    memref.store %32, %arg4[%c0_13, %c0_14] : memref<1x1xf32, #tpu.memory_space<smem>>
    return
  }
}

module attributes {stable_mosaic.version = 11 : i64} {
  func.func @conv_gemm_kernel(%arg0: i32, %arg1: i32, %arg2: memref<8x36xbf16, #tpu.memory_space<vmem>>, %arg3: memref<8x1xf32, #tpu.memory_space<vmem>>, %arg4: memref<1x36x128xbf16, #tpu.memory_space<vmem>>, %arg5: memref<1x8x128xf32, #tpu.memory_space<vmem>>) attributes {dimension_semantics = [#tpu.dimension_semantics<parallel>, #tpu.dimension_semantics<parallel>], iteration_bounds = array<i64: 2, 2>, scalar_prefetch = 0 : i64, scratch_operands = 0 : i64, tpu.core_type = #tpu.core_type<tc>, window_params = [{pipeline_mode = #tpu.pipeline_mode<synchronous>, transform_indices = @transform_0, window_bounds = array<i64: 8, 36>}, {pipeline_mode = #tpu.pipeline_mode<synchronous>, transform_indices = @transform_1, window_bounds = array<i64: 8, 1>}, {transform_indices = @transform_2, window_bounds = array<i64: 1, 36, 128>}, {transform_indices = @transform_3, window_bounds = array<i64: 1, 8, 128>}]} {
    %c0 = arith.constant 0 : index
    %c0_0 = arith.constant 0 : index
    %0 = vector.load %arg2[%c0, %c0_0] : memref<8x36xbf16, #tpu.memory_space<vmem>>, vector<8x36xbf16>
    %c0_1 = arith.constant 0 : index
    %c0_2 = arith.constant 0 : index
    %c0_3 = arith.constant 0 : index
    %1 = vector.load %arg4[%c0_1, %c0_2, %c0_3] : memref<1x36x128xbf16, #tpu.memory_space<vmem>>, vector<1x36x128xbf16>
    %2 = vector.shape_cast %1 : vector<1x36x128xbf16> to vector<36x128xbf16>
    %cst = arith.constant dense<0.000000e+00> : vector<8x128xf32>
    %3 = tpu.matmul %0, %2, %cst {dimension_numbers = #tpu.dot_dimension_numbers<[1], [0], [0], [1], [0, 0, 1, 1], [], []>} : vector<8x36xbf16>, vector<36x128xbf16>, vector<8x128xf32> -> vector<8x128xf32>
    %c0_4 = arith.constant 0 : index
    %c0_5 = arith.constant 0 : index
    %4 = vector.load %arg3[%c0_4, %c0_5] : memref<8x1xf32, #tpu.memory_space<vmem>>, vector<8x1xf32>
    %5 = vector.broadcast %4 : vector<8x1xf32> to vector<8x128xf32>
    %6 = arith.addf %3, %5 : vector<8x128xf32>
    %c0_6 = arith.constant 0 : index
    %c0_7 = arith.constant 0 : index
    %c0_8 = arith.constant 0 : index
    %7 = vector.load %arg5[%c0_6, %c0_7, %c0_8] : memref<1x8x128xf32, #tpu.memory_space<vmem>>, vector<1x8x128xf32>
    %8 = vector.shape_cast %7 : vector<1x8x128xf32> to vector<8x128xf32>
    %9 = vector.shape_cast %6 : vector<8x128xf32> to vector<1x8x128xf32>
    tpu.vector_store %arg5[%c0_6, %c0_7, %c0_8], %9 {strides = array<i32>} : memref<1x8x128xf32, #tpu.memory_space<vmem>>, vector<1x8x128xf32>,
    return
  }
  func.func @transform_0(%arg0: i32, %arg1: i32) -> (i32, i32) {
    %c0_i32 = arith.constant 0 : i32
    %c0_i32_0 = arith.constant 0 : i32
    %c0_i32_1 = arith.constant 0 : i32
    return %c0_i32, %c0_i32_0 : i32, i32
  }
  func.func @transform_1(%arg0: i32, %arg1: i32) -> (i32, i32) {
    %c0_i32 = arith.constant 0 : i32
    %c0_i32_0 = arith.constant 0 : i32
    %c0_i32_1 = arith.constant 0 : i32
    return %c0_i32, %c0_i32_0 : i32, i32
  }
  func.func @transform_2(%arg0: i32, %arg1: i32) -> (i32, i32, i32) {
    %c0_i32 = arith.constant 0 : i32
    %c0_i32_0 = arith.constant 0 : i32
    return %arg0, %c0_i32, %arg1 : i32, i32, i32
  }
  func.func @transform_3(%arg0: i32, %arg1: i32) -> (i32, i32, i32) {
    %c0_i32 = arith.constant 0 : i32
    %c0_i32_0 = arith.constant 0 : i32
    return %arg0, %c0_i32, %arg1 : i32, i32, i32
  }
}

</mosaic_0001>

<llo_original>
// kernel: spectral_norm_conv2d.2
$region0: #{spectral_norm_conv2d.2}
  #allocation0 [shape = 'u32[]', space=smem, size = 0x4, offset = 0x4, fixed_abs, tag = 'smem constant byte address 0x4 - core index']
  #allocation1 [shape = 'u32[144,128]{1,0:T(1,128)}', space=vmem, size = 0x12000, scoped, tag = 'internal scratch']
  %s0 = inlined_call_operand.vmem [shape: f32[8,36], index: 0, kind: input, shape index: {}]
  %s1 = inlined_call_operand.vmem [shape: f32[8,1], index: 1, kind: input, shape index: {}]
  %s2 = inlined_call_operand.vmem [shape: f32[8,1], index: 2, kind: output, shape index: {0}]
  %s3 = inlined_call_operand.hbm [shape: f32[1,36], index: 3, kind: output, shape index: {1}]
  %s4 = inlined_call_operand.hbm [shape: f32[1,1], index: 4, kind: output, shape index: {2}]
  %5 = xla_tuple %s2, %s3, %s4
  %s6 = sld [smem:[#allocation0]]
  $region34: #{spectral_norm_conv2d.2} parent=0
    _
  %s8 = ssub.s32 1, %s6
  %s9 = scalar_select 0, %s8, %s6
  $region1: #{spectral_norm_conv2d.2} parent=0
    #allocation2 [shape = 'u8[512]{0}', space=vmem, size = 0x400, scoped, tag = 'output window, operand 1, single buffered']
    #allocation3 [shape = 's32[1]{0}', space=sflag, size = 0x4, scoped, tag = 'scoped memory for spectral_norm_conv2d.2']
    #allocation4 [shape = 's32[1]{0}', space=sflag, size = 0x4, scoped, tag = 'scoped memory for spectral_norm_conv2d.2']
    #allocation5 [shape = 'u8[512]{0}', space=smem, size = 0x200, scoped, tag = 'output window, operand 2, single buffered']
    %10 = vsyncpa [#allocation3], 0
    %11 = vsyncpa [#allocation4], 0
    // Predicated region
    $region2: #{spectral_norm_conv2d.2} parent=1 // pred_check
      _
    $region3: #{spectral_norm_conv2d.2} parent=1 // pred_check_branch
      %13 = sbr.rel (0) target = $region5
    $region4: #{spectral_norm_conv2d.2} parent=1 // pred_region
      _
    $region5: #{spectral_norm_conv2d.2} parent=1 // pred_fallthru
      _
    // Predicated region
    $region6: #{spectral_norm_conv2d.2} parent=1 // pred_check
      _
    $region7: #{spectral_norm_conv2d.2} parent=1 // pred_check_branch
      %15 = sbr.rel (0) target = $region9
    $region8: #{spectral_norm_conv2d.2} parent=1 // pred_region
      _
    $region9: #{spectral_norm_conv2d.2} parent=1 // pred_fallthru
      _
    %v16 = vld [vmem:[%s0] sm:$0xff]
    %v17 = vld [vmem:[%s1] sm:$0xff]
    %19 = vset.pattern.permute.xlu0 0
    %20 = vperm.xlu0 %19, %v17
    %v21 = vpop.permute.xlu0 %20
    %v23 = vmul.f32 %v16, %v21
    %vm24 = vcmask 293888
    %v25 = vsel %vm24, %v23, 0.0
    %v26 = vrot.slane %v25, 4
    %v27 = vadd.f32 %v25, %v26
    %v28 = vrot.slane %v27, 2
    %v29 = vadd.f32 %v27, %v28
    %v30 = vrot.slane %v29, 1
    %v31 = vadd.f32 %v29, %v30
    %v32 = vmul.f32 %v31, %v31
    %vm33 = vcmask 286720
    %v34 = vsel %vm33, %v32, 0.0
    %35 = vadd.xlane.f32.xlu0 %v34
    %v36 = vpop.xlane.xlu0 %35
    %v37 = vrot.slane %v36, 4
    %v38 = vadd.f32 %v36, %v37
    %v39 = vrot.slane %v38, 2
    %v40 = vadd.f32 %v38, %v39
    %v41 = vrot.slane %v40, 1
    %v42 = vadd.f32 %v40, %v41
    %s43 = vtos %v42
    %v44 = vstv %s43
    %v45 = vrsqrt.pop %v44
    %v46 = vmul.f32 %v44, %v45
    %vm47 = vcmp.eq.f32.partialorder %v44, inf
    %v48 = vsel %vm47, %v44, %v46
    %vm49 = vcmp.eq.f32.partialorder %v44, 0.0
    %v50 = vand.u32 %v44, 2147483648
    %v51 = vsel %vm49, %v50, %v48
    %s52 = vtos %v51
    %s53 = sadd.f32 %s52, 1e-12
    %v54 = vstv %s53
    %v55 = vrcp.pop %v54
    %v56 = vmul.f32 %v31, %v55
    %v57 = vmul.f32 %v16, %v56
    %v58 = vsel %vm24, %v57, 0.0
    %59 = vadd.xlane.f32.xlu0 %v58
    %v60 = vpop.xlane.xlu0 %59
    %v61 = vmul.f32 %v60, %v60
    %vm62 = vcmask 7168
    %v63 = vsel %vm62, %v61, 0.0
    %64 = vadd.xlane.f32.xlu0 %v63
    %v65 = vpop.xlane.xlu0 %64
    %v66 = vrot.slane %v65, 4
    %v67 = vadd.f32 %v65, %v66
    %v68 = vrot.slane %v67, 2
    %v69 = vadd.f32 %v67, %v68
    %v70 = vrot.slane %v69, 1
    %v71 = vadd.f32 %v69, %v70
    %s72 = vtos %v71
    %v73 = vstv %s72
    %v74 = vrsqrt.pop %v73
    %v75 = vmul.f32 %v73, %v74
    %vm76 = vcmp.eq.f32.partialorder %v73, inf
    %v77 = vsel %vm76, %v73, %v75
    %vm78 = vcmp.eq.f32.partialorder %v73, 0.0
    %v79 = vand.u32 %v73, 2147483648
    %v80 = vsel %vm78, %v79, %v77
    %s81 = vtos %v80
    %s82 = sadd.f32 %s81, 1e-12
    %v83 = vstv %s82
    %v84 = vrcp.pop %v83
    %v85 = vmul.f32 %v60, %v84
    %v86 = vmul.f32 %v85, %v60
    %v87 = vsel %vm62, %v86, 0.0
    %88 = vadd.xlane.f32.xlu0 %v87
    %v89 = vpop.xlane.xlu0 %88
    %v90 = vrot.slane %v89, 4
    %v91 = vadd.f32 %v89, %v90
    %v92 = vrot.slane %v91, 2
    %v93 = vadd.f32 %v91, %v92
    %v94 = vrot.slane %v93, 1
    %v95 = vadd.f32 %v93, %v94
    %s96 = vtos %v95
    %97 = vst.msk [vmem:[%s2] sm:$0xff] %vm62, %v85
    %98 = vst.msk [vmem:[#allocation2] sm:$0x1] %vm33, %v56
    %s99 = scalar_lea.smem [#allocation5], 0
    %100 = sst [smem:[%s99]] %s96
    // Predicated region
    $region10: #{spectral_norm_conv2d.2} parent=1 // pred_check
      _
    $region11: #{spectral_norm_conv2d.2} parent=1 // pred_check_branch
      %102 = sbr.rel (0) target = $region13
    $region12: #{spectral_norm_conv2d.2} parent=1 // pred_region
      _
    $region13: #{spectral_norm_conv2d.2} parent=1 // pred_fallthru
      _
    // Predicated region
    $region14: #{spectral_norm_conv2d.2} parent=1 // pred_check
      _
    $region15: #{spectral_norm_conv2d.2} parent=1 // pred_check_branch
      %104 = sbr.rel (0) target = $region17
    $region16: #{spectral_norm_conv2d.2} parent=1 // pred_region
      %s106 = ssub.s32 16, 16
      %107 = vsyncadd [#allocation3], %s106
      %s109 = sshll.u32 [#allocation2], 4
      %s110 = int_to_ptr.vmem [resolvable:$true] %s109
      %112 = dma.vmem_to_hbm [thread:$0]  %s110, 16, %s3, [#allocation3]
    $region17: #{spectral_norm_conv2d.2} parent=1 // pred_fallthru
      _
    // Predicated region
    $region18: #{spectral_norm_conv2d.2} parent=1 // pred_check
      _
    $region19: #{spectral_norm_conv2d.2} parent=1 // pred_check_branch
      %114 = sbr.rel (0) target = $region21
    $region20: #{spectral_norm_conv2d.2} parent=1 // pred_region
      %s116 = ssub.s32 16, 16
      %117 = vsyncadd [#allocation4], %s116
      %120 = dma.smem_to_hbm [#allocation5], 16, %s4, [#allocation4]
    $region21: #{spectral_norm_conv2d.2} parent=1 // pred_fallthru
      _
    // Predicated region
    $region22: #{spectral_norm_conv2d.2} parent=1 // pred_check
      _
    $region23: #{spectral_norm_conv2d.2} parent=1 // pred_check_branch
      %122 = sbr.rel (0) target = $region25
    $region24: #{spectral_norm_conv2d.2} parent=1 // pred_region
      _
    $region25: #{spectral_norm_conv2d.2} parent=1 // pred_fallthru
      _
    // Predicated region
    $region26: #{spectral_norm_conv2d.2} parent=1 // pred_check
      _
    $region27: #{spectral_norm_conv2d.2} parent=1 // pred_check_branch
      %124 = sbr.rel (0) target = $region29
    $region28: #{spectral_norm_conv2d.2} parent=1 // pred_region
      %125 = dma.done [#allocation3], 16
    $region29: #{spectral_norm_conv2d.2} parent=1 // pred_fallthru
      _
    // Predicated region
    $region30: #{spectral_norm_conv2d.2} parent=1 // pred_check
      _
    $region31: #{spectral_norm_conv2d.2} parent=1 // pred_check_branch
      %127 = sbr.rel (0) target = $region33
    $region32: #{spectral_norm_conv2d.2} parent=1 // pred_region
      %128 = dma.done [#allocation4], 16
    $region33: #{spectral_norm_conv2d.2} parent=1 // pred_fallthru
      _
    %129 = sfence
    %130 = vsyncpa [#allocation3], 1
    %131 = vsyncpa [#allocation4], 1

// kernel: spectral_norm_conv2d.3
$region0: #{spectral_norm_conv2d.3}
  #allocation0 [shape = 'u32[]', space=smem, size = 0x4, offset = 0x4, fixed_abs, tag = 'smem constant byte address 0x4 - core index']
  #allocation1 [shape = 'u32[144,128]{1,0:T(1,128)}', space=vmem, size = 0x12000, scoped, tag = 'internal scratch']
  %s0 = inlined_call_operand.vmem [shape: bf16[8,36], index: 0, kind: input, shape index: {}]
  %s1 = inlined_call_operand.vmem [shape: f32[8,1], index: 1, kind: input, shape index: {}]
  %s2 = inlined_call_operand.vmem [shape: bf16[2,36,256], index: 2, kind: input, shape index: {}]
  %s3 = inlined_call_operand.vmem [shape: f32[2,8,256], index: 3, kind: output, shape index: {}]
  %s4 = sld [smem:[#allocation0]]
  $region86: #{spectral_norm_conv2d.3} parent=0
    _
  %s6 = ssub.s32 1, %s4
  %s7 = scalar_select 0, %s6, %s4
  $region1: #{spectral_norm_conv2d.3} parent=0
    #allocation2 [shape = 'u8[20480]{0}', space=vmem, size = 0x5000, scoped, tag = 'input window, operand 2']
    loop: start=0, step=1, limit=6
    $region2: #{spectral_norm_conv2d.3} parent=1 // loop_pre_header
      _
    $region3: #{spectral_norm_conv2d.3} parent=1 // loop_header
      %s9 = sphi 0, %s13
      %p10 = scmp.ge.s32.totalorder %s9, 6
      %s16 = sphi 0, %s28
      %s17 = sphi 0, %s24
      %s18 = sphi 0, %s16
      %s19 = sphi 0, %s17
      %s20 = sphi 0, %s18
      %s21 = sphi 0, %s19
      %s29 = sphi 0, %s29
      %s31 = sphi 0, %s29
      %s32 = sphi 0, %s31
      %s46 = sphi 0, %s32
      %s50 = sphi 0, %s50
      %s52 = sphi 0, %s50
      %s53 = sphi 0, %s52
      %s67 = sphi 0, %s53
      %s75 = sphi 0, %s77
      %s78 = sphi 0, %s75
      %s79 = sphi 0, %s78
      %s95 = sphi 0, %s79
      %s103 = sphi 0, %s105
      %s106 = sphi 0, %s103
      %s107 = sphi 0, %s106
      %s123 = sphi 0, %s107
    $region4: #{spectral_norm_conv2d.3} parent=1 // loop_header_branch
      %12 = sbr.rel (%p10) target = $region8
    $region5: #{spectral_norm_conv2d.3} parent=1 // loop_body
      %s14 = ssub.s32 %s9, 1
      %s15 = ssub.s32 %s9, 2
      %s22 = sadd.s32 1, %s17
      %p23 = scmp.ge.s32.totalorder %s22, 2
      %s24 = scalar_select %p23, 0, %s22
      %s25 = sadd.s32 1, %s16
      %s26 = scalar_select %p23, %s25, %s16
      %p27 = scmp.ge.s32.totalorder %s26, 2
      %s28 = scalar_select %p27, 0, %s26
      %s30 = sadd.s32 %s29, 1
      %p33 = scmp.eq.s32.totalorder %s9, 3
      %p34 = scmp.ne.s32.totalorder %s29, %s31
      %p35 = scmp.eq.s32.totalorder %s9, 0
      %p36 = por %p34, %p35
      %p37 = scmp.ne.s32.totalorder %s29, %s31
      %p38 = scmp.eq.s32.totalorder %s14, 3
      %p39 = por %p37, %p38
      %p40 = scmp.ne.s32.totalorder %s31, %s32
      %p41 = scmp.eq.s32.totalorder %s14, 0
      %p42 = por %p40, %p41
      %p43 = scmp.ne.s32.totalorder %s31, %s32
      %p44 = scmp.eq.s32.totalorder %s15, 3
      %p45 = por %p43, %p44
      %p47 = scmp.ne.s32.totalorder %s32, %s46
      %p48 = scmp.eq.s32.totalorder %s15, 0
      %p49 = por %p47, %p48
      %s51 = sadd.s32 %s50, 1
      %p54 = scmp.eq.s32.totalorder %s9, 3
      %p55 = scmp.ne.s32.totalorder %s50, %s52
      %p56 = scmp.eq.s32.totalorder %s9, 0
      %p57 = por %p55, %p56
      %p58 = scmp.ne.s32.totalorder %s50, %s52
      %p59 = scmp.eq.s32.totalorder %s14, 3
      %p60 = por %p58, %p59
      %p61 = scmp.ne.s32.totalorder %s52, %s53
      %p62 = scmp.eq.s32.totalorder %s14, 0
      %p63 = por %p61, %p62
      %p64 = scmp.ne.s32.totalorder %s52, %s53
      %p65 = scmp.eq.s32.totalorder %s15, 3
      %p66 = por %p64, %p65
      %p68 = scmp.ne.s32.totalorder %s53, %s67
      %p69 = scmp.eq.s32.totalorder %s15, 0
      %p70 = por %p68, %p69
      %s71 = ssub.s32 %s16, %s28
      %s72 = ssub.s32 %s17, %s24
      %s73 = sor.u32 %s71, %s72
      %p74 = scmp.eq.s32.totalorder %s73, 0
      %s76 = sadd.s32 %s75, 1
      %s77 = scalar_select %p74, %s75, %s76
      %p80 = pneg %p74
      %p81 = scmp.eq.s32.totalorder %s9, 3
      %p82 = por %p80, %p81
      %p83 = scmp.ne.s32.totalorder %s75, %s78
      %p84 = scmp.eq.s32.totalorder %s9, 0
      %p85 = por %p83, %p84
      %p86 = scmp.ne.s32.totalorder %s75, %s78
      %p87 = scmp.eq.s32.totalorder %s14, 3
      %p88 = por %p86, %p87
      %p89 = scmp.ne.s32.totalorder %s78, %s79
      %p90 = scmp.eq.s32.totalorder %s14, 0
      %p91 = por %p89, %p90
      %p92 = scmp.ne.s32.totalorder %s78, %s79
      %p93 = scmp.eq.s32.totalorder %s15, 3
      %p94 = por %p92, %p93
      %p96 = scmp.ne.s32.totalorder %s79, %s95
      %p97 = scmp.eq.s32.totalorder %s15, 0
      %p98 = por %p96, %p97
      %s99 = ssub.s32 %s16, %s28
      %s100 = ssub.s32 %s17, %s24
      %s101 = sor.u32 %s99, %s100
      %p102 = scmp.eq.s32.totalorder %s101, 0
      %s104 = sadd.s32 %s103, 1
      %s105 = scalar_select %p102, %s103, %s104
      %p108 = pneg %p102
      %p109 = scmp.eq.s32.totalorder %s9, 3
      %p110 = por %p108, %p109
      %p111 = scmp.ne.s32.totalorder %s103, %s106
      %p112 = scmp.eq.s32.totalorder %s9, 0
      %p113 = por %p111, %p112
      %p114 = scmp.ne.s32.totalorder %s103, %s106
      %p115 = scmp.eq.s32.totalorder %s14, 3
      %p116 = por %p114, %p115
      %p117 = scmp.ne.s32.totalorder %s106, %s107
      %p118 = scmp.eq.s32.totalorder %s14, 0
      %p119 = por %p117, %p118
      %p120 = scmp.ne.s32.totalorder %s106, %s107
      %p121 = scmp.eq.s32.totalorder %s15, 3
      %p122 = por %p120, %p121
      %p124 = scmp.ne.s32.totalorder %s107, %s123
      %p125 = scmp.eq.s32.totalorder %s15, 0
      %p126 = por %p124, %p125
      %p127 = scmp.le.s32.totalorder 1, %s9
      %p128 = scmp.lt.s32.totalorder %s9, 5
      %p129 = pnand %p127, %p128
      %p130 = pneg %p129
      // Predicated region
      $region9: #{spectral_norm_conv2d.3} parent=5 // pred_check
        _
      $region10: #{spectral_norm_conv2d.3} parent=5 // pred_check_branch
        %132 = sbr.rel (%p129) target = $region12
      $region11: #{spectral_norm_conv2d.3} parent=5 // pred_region
        %s133 = ssub.s32 %s9, 1
        // Predicated region
        $region13: #{spectral_norm_conv2d.3} parent=11 // pred_check
          %p134 = pneg %p42
        $region14: #{spectral_norm_conv2d.3} parent=11 // pred_check_branch
          %136 = sbr.rel (%p134) target = $region16
        $region15: #{spectral_norm_conv2d.3} parent=11 // pred_region
          _
        $region16: #{spectral_norm_conv2d.3} parent=11 // pred_fallthru
          _
        // Predicated region
        $region17: #{spectral_norm_conv2d.3} parent=11 // pred_check
          %p137 = pneg %p63
        $region18: #{spectral_norm_conv2d.3} parent=11 // pred_check_branch
          %139 = sbr.rel (%p137) target = $region20
        $region19: #{spectral_norm_conv2d.3} parent=11 // pred_region
          _
        $region20: #{spectral_norm_conv2d.3} parent=11 // pred_fallthru
          _
      $region12: #{spectral_norm_conv2d.3} parent=5 // pred_fallthru
        _
      %p140 = scmp.lt.s32.totalorder %s9, 4
      // Predicated region
      $region21: #{spectral_norm_conv2d.3} parent=5 // pred_check
        %p141 = pneg %p140
      $region22: #{spectral_norm_conv2d.3} parent=5 // pred_check_branch
        %143 = sbr.rel (%p141) target = $region24
      $region23: #{spectral_norm_conv2d.3} parent=5 // pred_region
        // Predicated region
        $region25: #{spectral_norm_conv2d.3} parent=23 // pred_check
          %p144 = pneg %p85
        $region26: #{spectral_norm_conv2d.3} parent=23 // pred_check_branch
          %146 = sbr.rel (%p144) target = $region28
        $region27: #{spectral_norm_conv2d.3} parent=23 // pred_region
          %s147 = sand.u32 %s75, 1
          %s148 = sand.u32 %s75, 1
          %s149 = smul.addr %s148, 20
          %s150 = scalar_lea.vmem [#allocation2], %s149
          %s151 = smul.addr %s16, 10
          %s152 = sadd.s32 %s17, %s151
          %s153 = smul.addr %s152, 4
          %s154 = scalar_lea.vmem %s2, %s153
          // Predicated region
          $region29: #{spectral_norm_conv2d.3} parent=27 // pred_check
            _
          $region30: #{spectral_norm_conv2d.3} parent=27 // pred_check_branch
            %156 = sbr.rel (0) target = $region32
          $region31: #{spectral_norm_conv2d.3} parent=27 // pred_region
            // Predicated region
            $region33: #{spectral_norm_conv2d.3} parent=31 // pred_check
              _
            $region34: #{spectral_norm_conv2d.3} parent=31 // pred_check_branch
              %158 = sbr.rel target = $region36
            $region35: #{spectral_norm_conv2d.3} parent=31 // pred_region
              // Predicated region
              $region48: #{spectral_norm_conv2d.3} parent=35 // pred_check
                _
              $region49: #{spectral_norm_conv2d.3} parent=35 // pred_check_branch
                %181 = sbr.rel (0) target = $region51
              $region50: #{spectral_norm_conv2d.3} parent=35 // pred_region
                loop: start=0, step=1, limit=1
                $region52: #{spectral_norm_conv2d.3} parent=50 // loop_pre_header
                  _
                $region53: #{spectral_norm_conv2d.3} parent=50 // loop_header
                  %s183 = sphi 0, %s187
                  %p184 = scmp.ge.s32.totalorder %s183, 1
                  %s188 = sphi %s154, %s154
                  %s189 = sphi %s150, %s150
                $region54: #{spectral_norm_conv2d.3} parent=50 // loop_header_branch
                  %186 = sbr.rel (%p184) target = $region58
                $region55: #{spectral_norm_conv2d.3} parent=50 // loop_body
                  _
                $region56: #{spectral_norm_conv2d.3} parent=50 // loop_footer
                  %s187 = sadd.s32 1, %s183
                $region57: #{spectral_norm_conv2d.3} parent=50 // loop_footer_branch
                  %182 = sbr.rel target = $region53
                $region58: #{spectral_norm_conv2d.3} parent=50 // loop_exit
                  _
                loop: start=0, step=1, limit=1
                $region59: #{spectral_norm_conv2d.3} parent=50 // loop_pre_header
                  _
                $region60: #{spectral_norm_conv2d.3} parent=50 // loop_header
                  %s192 = sphi 0, %s196
                  %p193 = scmp.ge.s32.totalorder %s192, 1
                  %s197 = sphi %s154, %s154
                  %s198 = sphi %s150, %s150
                $region61: #{spectral_norm_conv2d.3} parent=50 // loop_header_branch
                  %195 = sbr.rel (%p193) target = $region65
                $region62: #{spectral_norm_conv2d.3} parent=50 // loop_body
                  %v199 = vld [vmem:[%s197] sm:$0xf]
                  %200 = vst [vmem:[%s198] sm:$0xf] %v199
                  %v201 = vld [vmem:[%s197 + $0x8] sm:$0xf]
                  %202 = vst [vmem:[%s198 + $0x4] sm:$0xf] %v201
                  %v203 = vld [vmem:[%s197 + $0x10] sm:$0xf]
                  %204 = vst [vmem:[%s198 + $0x8] sm:$0xf] %v203
                  %v205 = vld [vmem:[%s197 + $0x18] sm:$0xf]
                  %206 = vst [vmem:[%s198 + $0xc] sm:$0xf] %v205
                  %v207 = vld [vmem:[%s197 + $0x20] sm:$0xf]
                  %208 = vst [vmem:[%s198 + $0x10] sm:$0xf] %v207
                $region63: #{spectral_norm_conv2d.3} parent=50 // loop_footer
                  %s196 = sadd.s32 1, %s192
                $region64: #{spectral_norm_conv2d.3} parent=50 // loop_footer_branch
                  %191 = sbr.rel target = $region60
                $region65: #{spectral_norm_conv2d.3} parent=50 // loop_exit
                  _
              $region51: #{spectral_norm_conv2d.3} parent=35 // pred_fallthru
                _
            $region36: #{spectral_norm_conv2d.3} parent=31 // pred_fallthru
              _
            // Predicated region
            $region37: #{spectral_norm_conv2d.3} parent=31 // pred_check
              _
            $region38: #{spectral_norm_conv2d.3} parent=31 // pred_check_branch
              %160 = sbr.rel (0) target = $region40
            $region39: #{spectral_norm_conv2d.3} parent=31 // pred_region
              loop: start=0, step=1, limit=1
              $region41: #{spectral_norm_conv2d.3} parent=39 // loop_pre_header
                _
              $region42: #{spectral_norm_conv2d.3} parent=39 // loop_header
                %s163 = sphi 0, %s167
                %p164 = scmp.ge.s32.totalorder %s163, 1
                %s168 = sphi %s154, %s154
                %s169 = sphi %s150, %s150
              $region43: #{spectral_norm_conv2d.3} parent=39 // loop_header_branch
                %166 = sbr.rel (%p164) target = $region47
              $region44: #{spectral_norm_conv2d.3} parent=39 // loop_body
                %v170 = vld [vmem:[%s168] sm:$0xf]
                %171 = vst [vmem:[%s169] sm:$0xf] %v170
                %v172 = vld [vmem:[%s168 + $0x8] sm:$0xf]
                %173 = vst [vmem:[%s169 + $0x4] sm:$0xf] %v172
                %v174 = vld [vmem:[%s168 + $0x10] sm:$0xf]
                %175 = vst [vmem:[%s169 + $0x8] sm:$0xf] %v174
                %v176 = vld [vmem:[%s168 + $0x18] sm:$0xf]
                %177 = vst [vmem:[%s169 + $0xc] sm:$0xf] %v176
                %v178 = vld [vmem:[%s168 + $0x20] sm:$0xf]
                %179 = vst [vmem:[%s169 + $0x10] sm:$0xf] %v178
              $region45: #{spectral_norm_conv2d.3} parent=39 // loop_footer
                %s167 = sadd.s32 1, %s163
              $region46: #{spectral_norm_conv2d.3} parent=39 // loop_footer_branch
                %162 = sbr.rel target = $region42
              $region47: #{spectral_norm_conv2d.3} parent=39 // loop_exit
                _
            $region40: #{spectral_norm_conv2d.3} parent=31 // pred_fallthru
              _
          $region32: #{spectral_norm_conv2d.3} parent=27 // pred_fallthru
            _
          %209 = vnop
        $region28: #{spectral_norm_conv2d.3} parent=23 // pred_fallthru
          _
      $region24: #{spectral_norm_conv2d.3} parent=5 // pred_fallthru
        _
      %p210 = scmp.le.s32.totalorder 1, %s9
      %p211 = scmp.lt.s32.totalorder %s9, 5
      %p212 = pnand %p210, %p211
      %p213 = pneg %p212
      // Predicated region
      $region66: #{spectral_norm_conv2d.3} parent=5 // pred_check
        _
      $region67: #{spectral_norm_conv2d.3} parent=5 // pred_check_branch
        %215 = sbr.rel (%p212) target = $region69
      $region68: #{spectral_norm_conv2d.3} parent=5 // pred_region
        %s216 = ssub.s32 %s9, 1
        %s217 = sand.u32 %s78, 1
        %s218 = sand.u32 %s78, 1
        %s219 = smul.addr %s218, 20
        %s220 = scalar_lea.vmem [#allocation2], %s219
        // Predicated region
        $region70: #{spectral_norm_conv2d.3} parent=68 // pred_check
          %p221 = pneg %p91
        $region71: #{spectral_norm_conv2d.3} parent=68 // pred_check_branch
          %223 = sbr.rel (%p221) target = $region73
        $region72: #{spectral_norm_conv2d.3} parent=68 // pred_region
          _
        $region73: #{spectral_norm_conv2d.3} parent=68 // pred_fallthru
          _
        %p224 = pneg %p42
        %p225 = pneg %p39
        %p226 = pneg %p63
        %p227 = pneg %p60
        %s228 = sand.u32 %s78, 1
        %s229 = sand.u32 %s78, 1
        %s230 = smul.addr %s229, 20
        %s231 = scalar_lea.vmem [#allocation2], %s230
        %p232 = pneg %p91
        %p233 = pneg %p88
        %p234 = pneg %p119
        %p235 = pneg %p116
        %p236 = scmp.lt.s32.totalorder %s18, 1
        %s237 = scalar_select %p236, %s18, 1
        %p238 = scmp.lt.s32.totalorder %s19, 1
        %s239 = scalar_select %p238, %s19, 1
        %s240 = smul.addr %s237, 2
        %s241 = sadd.s32 %s239, %s240
        %s242 = smul.addr %s241, 8
        %s243 = scalar_lea.vmem %s3, %s242
        %p244 = scmp.lt.s32.totalorder %s18, 1
        %s245 = scalar_select %p244, %s18, 1
        %p246 = scmp.lt.s32.totalorder %s19, 1
        %s247 = scalar_select %p246, %s19, 1
        %s248 = smul.addr %s245, 2
        %s249 = sadd.s32 %s247, %s248
        %s250 = smul.addr %s249, 8
        %s251 = scalar_lea.vmem %s3, %s250
        %v253 = vld [vmem:[%s0] sm:$0xf]
        %v254 = vld [vmem:[%s220] sm:$0xf]
        %v255 = vld [vmem:[%s220 + $0x4] sm:$0xf]
        %v256 = vld [vmem:[%s220 + $0x8] sm:$0xf]
        %v257 = vld [vmem:[%s220 + $0xc] sm:$0xf]
        %v258 = vld [vmem:[%s220 + $0x10] sm:$0x3]
        %v259 = vld [vmem:[%s1] sm:$0xff]
        %261 = vset.pattern.permute.xlu0 0
        %262 = vperm.xlu0 %261, %v259
        %v263 = vpop.permute.xlu0 %262
        %v270 = vunpack.c.l.b16 %v254
        %v271 = vunpack.c.l.b16 %v255
        %v272 = vunpack.c.l.b16 %v256
        %v273 = vunpack.c.l.b16 %v257
        %v274 = vunpack.c.l.b16 %v258
        %v275 = vpack.c.b16 %v271, %v270
        %v276 = vpack.c.b16 %v273, %v272
        %v277 = vpack.c.b16 %v274, %v274
        %vm280 = vcmask 293888
        %v282 = vsel %vm280, %v253, 0
        %vm284 = vcmask 1041408
        %v286 = vsel %vm284, %v277, 0
        %288 = vmatprep.subr.bf16.mxu0 0
        %289 = vmatpush1.bf16.msra.mxu0 %v275
        %290 = vmatprep.subr.bf16.mxu0 0
        %291 = vmatpush1.bf16.msra.mxu0 %v276
        %292 = vmatprep.subr.bf16.mxu0 0
        %293 = vmatpush1.bf16.msra.mxu0 %v286
        %294 = vmatprep.subr.bf16.mxu0 0
        %295 = vmatpush1.bf16.msra.mxu0 0
        %296 = vmatprep.subr.bf16.mxu0 0
        %297 = vmatpush1.bf16.msra.mxu0 0
        %298 = vmatprep.subr.bf16.mxu0 0
        %299 = vmatpush1.bf16.msra.mxu0 0
        %300 = vmatprep.subr.bf16.mxu0 0
        %301 = vmatpush1.bf16.msra.mxu0 0
        %302 = vmatprep.subr.bf16.mxu0 0
        %303 = vmatpush1.bf16.msra.mxu0 0
        %304 = vmatprep.subr.bf16.mxu0 0
        %305 = vmatpush1.bf16.msra.mxu0 0
        %306 = vmatprep.subr.bf16.mxu0 0
        %307 = vmatpush1.bf16.msra.mxu0 0
        %308 = vmatprep.subr.bf16.mxu0 0
        %309 = vmatpush1.bf16.msra.mxu0 0
        %310 = vmatprep.subr.bf16.mxu0 0
        %311 = vmatpush1.bf16.msra.mxu0 0
        %312 = vmatprep.subr.bf16.mxu0 0
        %313 = vmatpush1.bf16.msra.mxu0 0
        %314 = vmatprep.subr.bf16.mxu0 0
        %315 = vmatpush1.bf16.msra.mxu0 0
        %316 = vmatprep.subr.bf16.mxu0 0
        %317 = vmatpush1.bf16.msra.mxu0 0
        %318 = vmatprep.subr.bf16.mxu0 0
        %319 = vmatpush1.bf16.msra.mxu0 0
        %320 = vmatprep.mubr.bf16.mxu0 0
        %321 = vmatmul.mubr.bf16.gmra.mrb[0].mxu0 %v282
        %v322 = vpop.f32.mrb[0].mxu0
        %v323 = vadd.f32 %v263, %v322
        %v324 = vpop.f32.mrb[0].mxu0
        %v325 = vpop.f32.mrb[0].mxu0
        %v326 = vpop.f32.mrb[0].mxu0
        %327 = vdwg.mxu0
        %328 = vst [vmem:[%s251] sm:$0xff] %v323
        %p329 = scmp.lt.s32.totalorder %s18, 1
        %s330 = scalar_select %p329, %s18, 1
        %p331 = scmp.lt.s32.totalorder %s19, 1
        %s332 = scalar_select %p331, %s19, 1
        %s333 = smul.addr %s330, 2
        %s334 = sadd.s32 %s332, %s333
        %s335 = smul.addr %s334, 8
        %s336 = scalar_lea.vmem %s3, %s335
        // Predicated region
        $region74: #{spectral_norm_conv2d.3} parent=68 // pred_check
          %p337 = pneg %p116
        $region75: #{spectral_norm_conv2d.3} parent=68 // pred_check_branch
          %339 = sbr.rel (%p337) target = $region77
        $region76: #{spectral_norm_conv2d.3} parent=68 // pred_region
          _
        $region77: #{spectral_norm_conv2d.3} parent=68 // pred_fallthru
          _
      $region69: #{spectral_norm_conv2d.3} parent=5 // pred_fallthru
        _
      %p340 = scmp.le.s32.totalorder 2, %s9
      // Predicated region
      $region78: #{spectral_norm_conv2d.3} parent=5 // pred_check
        %p341 = pneg %p340
      $region79: #{spectral_norm_conv2d.3} parent=5 // pred_check_branch
        %343 = sbr.rel (%p341) target = $region81
      $region80: #{spectral_norm_conv2d.3} parent=5 // pred_region
        %s344 = ssub.s32 %s9, 2
        // Predicated region
        $region82: #{spectral_norm_conv2d.3} parent=80 // pred_check
          %p345 = pneg %p122
        $region83: #{spectral_norm_conv2d.3} parent=80 // pred_check_branch
          %347 = sbr.rel (%p345) target = $region85
        $region84: #{spectral_norm_conv2d.3} parent=80 // pred_region
          %p348 = scmp.lt.s32.totalorder %s20, 1
          %s349 = scalar_select %p348, %s20, 1
          %p350 = scmp.lt.s32.totalorder %s21, 1
          %s351 = scalar_select %p350, %s21, 1
          %s352 = smul.addr %s349, 2
          %s353 = sadd.s32 %s351, %s352
          %s354 = smul.addr %s353, 8
          %s355 = scalar_lea.vmem %s3, %s354
        $region85: #{spectral_norm_conv2d.3} parent=80 // pred_fallthru
          _
      $region81: #{spectral_norm_conv2d.3} parent=5 // pred_fallthru
        _
    $region6: #{spectral_norm_conv2d.3} parent=1 // loop_footer
      %s13 = sadd.s32 1, %s9
    $region7: #{spectral_norm_conv2d.3} parent=1 // loop_footer_branch
      %8 = sbr.rel target = $region3
    $region8: #{spectral_norm_conv2d.3} parent=1 // loop_exit
      _

</llo_original>
